<compile_context>
chip_gen: v6e
topology: v6e:2x2x1
jax: 0.10.0
libtpu: 0.0.40
codegen_flags: <defaults>
</compile_context>

<pallas_src>
import functools

import jax
import jax.numpy as jnp
from jax import lax
from jax.experimental import pallas as pl
from jax.experimental.pallas import tpu as pltpu


# ---------------------------------------------------------------------------
# In-kernel helpers: masked 3-wide min/max pooling and the soft skeleton.
# ---------------------------------------------------------------------------

def _periodic_ne(idx, period, residue, extent):
    """mask[i] = (idx[i] % period) != residue, built without a vector modulo.

    Bitwise AND when `period` is a power of two; otherwise a short static
    chain of equality compares (one per boundary row/column).
    """
    if period & (period - 1) == 0:
        return (idx & (period - 1)) != residue
    hit = idx == residue
    r = residue + period
    while r < extent:
        hit = jnp.logical_or(hit, idx == r)
        r += period
    return jnp.logical_not(hit)


def _shift_same(x, delta, axis, valid):
    """y[i] = x[i + delta] along `axis` where `valid`, else y[i] = x[i].

    Substituting x itself at invalid (out-of-image / cross-image) positions is
    exact for min/max pooling (min(x,x)=x, max(x,x)=x), so no +/-inf sentinel
    is needed.  `delta` is a static +/-1; the roll shift is non-negative.
    """
    n = x.shape[axis]
    rolled = pltpu.roll(x, (-delta) % n, axis)   # rolled[i] = x[(i+delta) % n]
    return jnp.where(valid, rolled, x)


def _minpool3(x, axis, v_plus, v_minus):
    # 3-wide min pool, stride 1 (== -max_pool2d(-x, 3, stride 1, pad 1) on axis)
    return jnp.minimum(x, jnp.minimum(_shift_same(x, 1, axis, v_plus),
                                      _shift_same(x, -1, axis, v_minus)))


def _maxpool3(x, axis, v_plus, v_minus):
    # 3-wide max pool, stride 1 (== max_pool2d(x, 3, stride 1, pad 1) on axis)
    return jnp.maximum(x, jnp.maximum(_shift_same(x, 1, axis, v_plus),
                                      _shift_same(x, -1, axis, v_minus)))


def _soft_erode(x, masks):
    # min( -maxpool(-x,(3,1),pad(1,0)), -maxpool(-x,(1,3),pad(0,1)) )
    (rvp, rvm), (cvp, cvm) = masks
    return jnp.minimum(_minpool3(x, 0, rvp, rvm), _minpool3(x, 1, cvp, cvm))


def _soft_dilate(x, masks):
    # maxpool(x, (3,3), stride 1, pad 1) — separable for max
    (rvp, rvm), (cvp, cvm) = masks
    return _maxpool3(_maxpool3(x, 0, rvp, rvm), 1, cvp, cvm)


def _soft_skel(img, num_iter, masks):
    """Soft skeleton; carried-erosion restructuring (1 erode + 1 dilate/iter)."""
    eroded = _soft_erode(img, masks)                           # erode^1(img)
    skel = jnp.maximum(img - _soft_dilate(eroded, masks), 0.0)
    if num_iter <= 0:
        return skel

    def body(_, carry):
        skel, cur = carry                    # cur = erode^(j+1)(img) at iter j
        nxt = _soft_erode(cur, masks)        # erode^(j+2)(img)
        delta = jnp.maximum(cur - _soft_dilate(nxt, masks), 0.0)
        skel = skel + jnp.maximum(delta - skel * delta, 0.0)
        return skel, nxt

    # fori_loop (vs. a fully unrolled Python loop) bounds live ranges on large
    # slabs and keeps compile time flat.
    skel, _ = lax.fori_loop(0, num_iter, body, (skel, eroded))
    return skel


# ---------------------------------------------------------------------------
# Kernel body.
# ---------------------------------------------------------------------------

def _cldice_kernel(x_ref, out_ref, acc_ref, *, num_iter, H, W, KH,
                   compute_dtype):
    i = pl.program_id(1)                   # inner ("arbitrary") batch axis
    n = pl.num_programs(1)

    @pl.when(i == 0)
    def _init():
        acc_ref[...] = jnp.zeros_like(acc_ref)

    x = x_ref[0]                           # (2*KH, GW) f32: [pred ; true] slabs
    S = x.shape[0]
    GW = x.shape[1]

    # Boundary masks, hoisted: built once per grid step, reused by every pool
    # inside the skeleton loop.  Images tile the slab with period H along
    # sublanes (2*K images of H rows) and period W along lanes (G images).
    rows = lax.broadcasted_iota(jnp.int32, x.shape, 0)
    cols = lax.broadcasted_iota(jnp.int32, x.shape, 1)
    row_vp = _periodic_ne(rows, H, H - 1, S)     # row+1 stays inside its image
    row_vm = _periodic_ne(rows, H, 0, S)         # row-1 stays inside its image
    col_vp = _periodic_ne(cols, W, W - 1, GW)
    col_vm = _periodic_ne(cols, W, 0, GW)
    masks = ((row_vp, row_vm), (col_vp, col_vm))

    # Optional bf16 skeleton compute (v6e/v7x); accumulation stays f32.
    skel = _soft_skel(x.astype(compute_dtype), num_iter, masks)
    skel = skel.astype(jnp.float32)              # [skel_pred ; skel_true]

    y_pred = x[:KH]
    y_true = x[KH:]
    skel_pred = skel[:KH]
    skel_true = skel[KH:]

    # Per-step sublane reductions into 4 lane-rows of the tiny accumulator:
    # no full-slab accumulators and no cross-lane work in the hot loop.
    acc_ref[0:1, :] += jnp.sum(skel_pred * y_true, axis=0, keepdims=True)
    acc_ref[1:2, :] += jnp.sum(skel_pred, axis=0, keepdims=True)
    acc_ref[2:3, :] += jnp.sum(skel_true * y_pred, axis=0, keepdims=True)
    acc_ref[3:4, :] += jnp.sum(skel_true, axis=0, keepdims=True)

    @pl.when(i == n - 1)
    def _finalize():
        a = acc_ref[...]
        s_sp_yt = jnp.sum(a[0:1, :])       # sum(skel_pred * y_true)
        s_sp = jnp.sum(a[1:2, :])          # sum(skel_pred)
        s_st_yp = jnp.sum(a[2:3, :])       # sum(skel_true * y_pred)
        s_st = jnp.sum(a[3:4, :])          # sum(skel_true)
        lane = lax.broadcasted_iota(jnp.int32, out_ref.shape, 2)
        out = jnp.where(lane == 0, s_sp_yt, 0.0)
        out = jnp.where(lane == 1, s_sp, out)
        out = jnp.where(lane == 2, s_st_yp, out)
        out = jnp.where(lane == 3, s_st, out)
        out_ref[...] = out                 # single lane-dense store per core


# ---------------------------------------------------------------------------
# Host-side wrapper.
# ---------------------------------------------------------------------------

def _vmem_budget_bytes():
    """Per-core VMEM budget, leaving headroom for Pallas-internal scratch."""
    try:
        cap = int(pltpu.get_tpu_info().vmem_capacity_bytes)
    except Exception:
        cap = 64 * 2 ** 20          # conservative default (v7x per-core VMEM)
    return (cap * 3) // 4           # ~48 MiB on v7x, ~96 MiB on v5e/v6e


def _num_core_groups(nsteps):
    """Size of the leading 'parallel' grid axis (2 uses both v7x TensorCores)."""
    if nsteps < 2:
        return 1
    try:
        kind = jax.devices()[0].device_kind.lower()
    except Exception:
        kind = ""
    if "v7" in kind or "7x" in kind:   # 2 TensorCores per chip
        return 2
    # Single-core generations: split only when it adds no padded (zero) steps.
    return 2 if nsteps % 2 == 0 else 1


def soft_cldice_loss(y_true, y_pred, *, num_iter=20, smooth=1.0,
                     exclude_background=False, compute_dtype=jnp.float32):
    """Soft clDice loss (matches the PyTorch SoftCLDiceLoss forward).

    compute_dtype: dtype of the in-kernel skeleton iterations.  jnp.bfloat16
    is ~2x faster on v6e/v7x (packed bf16 VPU) at a small accuracy cost; keep
    the f32 default on v5e (no bf16 VPU) or when exact numerics matter.
    """
    y_true = jnp.asarray(y_true, jnp.float32)
    y_pred = jnp.asarray(y_pred, jnp.float32)
    if exclude_background and y_true.shape[1] > 1:
        y_true = y_true[:, 1:, :, :]
        y_pred = y_pred[:, 1:, :, :]

    B, C, H, W = y_true.shape
    N = B * C

    # ---- lane packing: G images side by side along the 128-lane axis -------
    G = max(1, 128 // W)
    GW = G * W
    nslab = -(-N // G)
    pad_imgs = nslab * G - N

    yt = y_true.reshape(N, H, W)
    yp = y_pred.reshape(N, H, W)
    if pad_imgs:
        # All-zero images have zero skeletons/products -> sums unaffected.
        z = jnp.zeros((pad_imgs, H, W), jnp.float32)
        yt = jnp.concatenate([yt, z], axis=0)
        yp = jnp.concatenate([yp, z], axis=0)
    # (nslab, H, GW): lane g*W + w of slab s holds image[s*G + g, h, w].
    yt = yt.reshape(nslab, G, H, W).transpose(0, 2, 1, 3).reshape(nslab, H, GW)
    yp = yp.reshape(nslab, G, H, W).transpose(0, 2, 1, 3).reshape(nslab, H, GW)

    # ---- sublane packing: K slab-pairs per grid step ------------------------
    vmem_budget = _vmem_budget_bytes()
    pair_bytes = 2 * H * GW * 4                    # one pred+true slab pair, f32
    # ~12 live pair-sized values: double-buffered input + fori_loop temporaries.
    k_vmem = max(1, vmem_budget // (12 * pair_bytes))
    sub_target = 1024 if vmem_budget > 80 * 2 ** 20 else 512   # v5e/v6e: 2x v7x
    k_rows = max(1, sub_target // (2 * H))
    K = int(min(nslab, k_rows, k_vmem))
    KH = K * H
    nsteps = -(-nslab // K)
    # TODO(synk): for single images too large for VMEM (e.g. 1024x1024 f32),
    # tile H into chunks with a (num_iter + 1)-row halo instead of whole-image
    # slabs.

    # ---- megacore: split steps over a leading "parallel" core axis ----------
    ncg = _num_core_groups(nsteps)
    steps_per_core = -(-nsteps // ncg)
    nsteps_padded = ncg * steps_per_core
    pad_slabs = nsteps_padded * K - nslab
    if pad_slabs:
        z = jnp.zeros((pad_slabs, H, GW), jnp.float32)
        yt = jnp.concatenate([yt, z], axis=0)
        yp = jnp.concatenate([yp, z], axis=0)

    # Single pre-stacked input: rows [0:KH] = pred slabs, [KH:2KH] = true slabs.
    x = jnp.concatenate([yp.reshape(nsteps_padded, KH, GW),
                         yt.reshape(nsteps_padded, KH, GW)], axis=1)

    in_spec = pl.BlockSpec((1, 2 * KH, GW),
                           lambda c, i: (c * steps_per_core + i, 0, 0))
    out_spec = pl.BlockSpec((1, 8, 128), lambda c, i: (c, 0, 0))

    step_bytes = 2 * KH * GW * 4
    vmem_limit = int(min(vmem_budget, max(32 * 2 ** 20, 14 * step_bytes)))

    cost = pl.CostEstimate(
        flops=int(nsteps_padded * 2 * KH * GW * 32 * (num_iter + 1)),
        transcendentals=0,
        bytes_accessed=int(x.size * 4 + ncg * 8 * 128 * 4))

    kernel = functools.partial(_cldice_kernel, num_iter=num_iter, H=H, W=W,
                               KH=KH, compute_dtype=compute_dtype)

    sums = pl.pallas_call(
        kernel,
        grid_spec=pltpu.PrefetchScalarGridSpec(
            num_scalar_prefetch=0,
            grid=(ncg, steps_per_core),
            in_specs=[in_spec],
            out_specs=out_spec,
            scratch_shapes=[pltpu.VMEM((8, GW), jnp.float32)]),
        out_shape=jax.ShapeDtypeStruct((ncg, 8, 128), jnp.float32),
        compiler_params=pltpu.CompilerParams(
            dimension_semantics=("parallel", "arbitrary"),
            vmem_limit_bytes=vmem_limit),
        cost_estimate=cost,
    )(x)

    tot = jnp.sum(sums[:, 0, :], axis=0)       # combine per-core partial sums
    s_sp_yt, s_sp, s_st_yp, s_st = tot[0], tot[1], tot[2], tot[3]
    tprec = (s_sp_yt + smooth) / (s_sp + smooth)
    tsens = (s_st_yp + smooth) / (s_st + smooth)
    epsilon = 1e-08
    return 1.0 - 2.0 * (tprec * tsens) / (tprec + tsens + epsilon)


if __name__ == "__main__":
    key = jax.random.PRNGKey(0)
    k1, k2 = jax.random.split(key)

    B, C, H, W = 2, 4, 16, 16
    # y_true: binary-ish ground truth in [0, 1]; y_pred: soft probabilities.
    y_true = (jax.random.uniform(k1, (B, C, H, W)) > 0.5).astype(jnp.float32)
    y_pred = jax.random.uniform(k2, (B, C, H, W), dtype=jnp.float32)

    loss = soft_cldice_loss(y_true, y_pred, num_iter=20, smooth=1.0,
                            exclude_background=False)
    jax.block_until_ready(loss)
    print("KERNEL_OK")
</pallas_src>

<mosaic_0001>
module attributes {stable_mosaic.version = 11 : i64} {
  func.func @_cldice_kernel(%arg0: i32, %arg1: i32, %arg2: memref<1x32x128xf32, #tpu.memory_space<vmem>>, %arg3: memref<1x8x128xf32, #tpu.memory_space<vmem>>, %arg4: memref<8x128xf32, #tpu.memory_space<vmem>>) attributes {dimension_semantics = [#tpu.dimension_semantics<parallel>, #tpu.dimension_semantics<arbitrary>], iteration_bounds = array<i64: 1, 1>, scalar_prefetch = 0 : i64, scratch_operands = 1 : i64, tpu.core_type = #tpu.core_type<tc>, window_params = [{transform_indices = @transform_0, window_bounds = array<i64: 1, 32, 128>}, {transform_indices = @transform_1, window_bounds = array<i64: 1, 8, 128>}]} {
    %c0_i32 = arith.constant 0 : i32
    %0 = arith.cmpi eq, %arg1, %c0_i32 : i32
    %1 = arith.extui %0 : i1 to i32
    %c0_i32_0 = arith.constant 0 : i32
    %2 = arith.cmpi ne, %1, %c0_i32_0 : i32
    scf.if %2 {
      %cst_36 = arith.constant 0.000000e+00 : f32
      %82 = vector.broadcast %cst_36 : f32 to vector<8x128xf32>
      %c0_37 = arith.constant 0 : index
      %c0_38 = arith.constant 0 : index
      %83 = vector.load %arg4[%c0_37, %c0_38] : memref<8x128xf32, #tpu.memory_space<vmem>>, vector<8x128xf32>
      tpu.vector_store %arg4[%c0_37, %c0_38], %82 {strides = array<i32>} : memref<8x128xf32, #tpu.memory_space<vmem>>, vector<8x128xf32>,
    } else {
    }
    %c0 = arith.constant 0 : index
    %c0_1 = arith.constant 0 : index
    %c0_2 = arith.constant 0 : index
    %3 = vector.load %arg2[%c0, %c0_1, %c0_2] : memref<1x32x128xf32, #tpu.memory_space<vmem>>, vector<1x32x128xf32>
    %4 = vector.shape_cast %3 : vector<1x32x128xf32> to vector<32x128xf32>
    %5 = tpu.iota {dimensions = array<i32: 0>} : vector<32x128xi32>
    %6 = tpu.iota {dimensions = array<i32: 1>} : vector<32x128xi32>
    %c15_i32 = arith.constant 15 : i32
    %7 = vector.broadcast %c15_i32 : i32 to vector<32x128xi32>
    %8 = arith.andi %5, %7 : vector<32x128xi32>
    %c15_i32_3 = arith.constant 15 : i32
    %9 = vector.broadcast %c15_i32_3 : i32 to vector<32x128xi32>
    %10 = arith.cmpi ne, %8, %9 : vector<32x128xi32>
    %c15_i32_4 = arith.constant 15 : i32
    %11 = vector.broadcast %c15_i32_4 : i32 to vector<32x128xi32>
    %12 = arith.andi %5, %11 : vector<32x128xi32>
    %c0_i32_5 = arith.constant 0 : i32
    %13 = vector.broadcast %c0_i32_5 : i32 to vector<32x128xi32>
    %14 = arith.cmpi ne, %12, %13 : vector<32x128xi32>
    %c15_i32_6 = arith.constant 15 : i32
    %15 = vector.broadcast %c15_i32_6 : i32 to vector<32x128xi32>
    %16 = arith.andi %6, %15 : vector<32x128xi32>
    %c15_i32_7 = arith.constant 15 : i32
    %17 = vector.broadcast %c15_i32_7 : i32 to vector<32x128xi32>
    %18 = arith.cmpi ne, %16, %17 : vector<32x128xi32>
    %c15_i32_8 = arith.constant 15 : i32
    %19 = vector.broadcast %c15_i32_8 : i32 to vector<32x128xi32>
    %20 = arith.andi %6, %19 : vector<32x128xi32>
    %c0_i32_9 = arith.constant 0 : i32
    %21 = vector.broadcast %c0_i32_9 : i32 to vector<32x128xi32>
    %22 = arith.cmpi ne, %20, %21 : vector<32x128xi32>
    %c31_i32 = arith.constant 31 : i32
    %23 = tpu.dynamic_rotate %4 by %c31_i32 dim 0 : vector<32x128xf32>, i32 -> vector<32x128xf32>
    %24 = arith.select %10, %23, %4 : vector<32x128xi1>, vector<32x128xf32>
    %c1_i32 = arith.constant 1 : i32
    %25 = tpu.dynamic_rotate %4 by %c1_i32 dim 0 : vector<32x128xf32>, i32 -> vector<32x128xf32>
    %26 = arith.select %14, %25, %4 : vector<32x128xi1>, vector<32x128xf32>
    %27 = arith.minimumf %24, %26 : vector<32x128xf32>
    %28 = arith.minimumf %4, %27 : vector<32x128xf32>
    %c127_i32 = arith.constant 127 : i32
    %29 = tpu.dynamic_rotate %4 by %c127_i32 dim 1 : vector<32x128xf32>, i32 -> vector<32x128xf32>
    %30 = arith.select %18, %29, %4 : vector<32x128xi1>, vector<32x128xf32>
    %c1_i32_10 = arith.constant 1 : i32
    %31 = tpu.dynamic_rotate %4 by %c1_i32_10 dim 1 : vector<32x128xf32>, i32 -> vector<32x128xf32>
    %32 = arith.select %22, %31, %4 : vector<32x128xi1>, vector<32x128xf32>
    %33 = arith.minimumf %30, %32 : vector<32x128xf32>
    %34 = arith.minimumf %4, %33 : vector<32x128xf32>
    %35 = arith.minimumf %28, %34 : vector<32x128xf32>
    %c31_i32_11 = arith.constant 31 : i32
    %36 = tpu.dynamic_rotate %35 by %c31_i32_11 dim 0 : vector<32x128xf32>, i32 -> vector<32x128xf32>
    %37 = arith.select %10, %36, %35 : vector<32x128xi1>, vector<32x128xf32>
    %c1_i32_12 = arith.constant 1 : i32
    %38 = tpu.dynamic_rotate %35 by %c1_i32_12 dim 0 : vector<32x128xf32>, i32 -> vector<32x128xf32>
    %39 = arith.select %14, %38, %35 : vector<32x128xi1>, vector<32x128xf32>
    %40 = arith.maximumf %37, %39 : vector<32x128xf32>
    %41 = arith.maximumf %35, %40 : vector<32x128xf32>
    %c127_i32_13 = arith.constant 127 : i32
    %42 = tpu.dynamic_rotate %41 by %c127_i32_13 dim 1 : vector<32x128xf32>, i32 -> vector<32x128xf32>
    %43 = arith.select %18, %42, %41 : vector<32x128xi1>, vector<32x128xf32>
    %c1_i32_14 = arith.constant 1 : i32
    %44 = tpu.dynamic_rotate %41 by %c1_i32_14 dim 1 : vector<32x128xf32>, i32 -> vector<32x128xf32>
    %45 = arith.select %22, %44, %41 : vector<32x128xi1>, vector<32x128xf32>
    %46 = arith.maximumf %43, %45 : vector<32x128xf32>
    %47 = arith.maximumf %41, %46 : vector<32x128xf32>
    %48 = arith.subf %4, %47 : vector<32x128xf32>
    %cst = arith.constant 0.000000e+00 : f32
    %49 = vector.broadcast %cst : f32 to vector<32x128xf32>
    %50 = arith.maximumf %48, %49 : vector<32x128xf32>
    %c0_i32_15 = arith.constant 0 : i32
    %c20_i32 = arith.constant 20 : i32
    %51 = arith.addi %c0_i32_15, %c20_i32 : i32
    %c1_i32_16 = arith.constant 1 : i32
    %52:2 = scf.for %arg5 = %c0_i32_15 to %51 step %c1_i32_16 iter_args(%arg6 = %50, %arg7 = %35) -> (vector<32x128xf32>, vector<32x128xf32>)  : i32 {
      %c31_i32_36 = arith.constant 31 : i32
      %82 = tpu.dynamic_rotate %arg7 by %c31_i32_36 dim 0 : vector<32x128xf32>, i32 -> vector<32x128xf32>
      %83 = arith.select %10, %82, %arg7 : vector<32x128xi1>, vector<32x128xf32>
      %c1_i32_37 = arith.constant 1 : i32
      %84 = tpu.dynamic_rotate %arg7 by %c1_i32_37 dim 0 : vector<32x128xf32>, i32 -> vector<32x128xf32>
      %85 = arith.select %14, %84, %arg7 : vector<32x128xi1>, vector<32x128xf32>
      %86 = arith.minimumf %83, %85 : vector<32x128xf32>
      %87 = arith.minimumf %arg7, %86 : vector<32x128xf32>
      %c127_i32_38 = arith.constant 127 : i32
      %88 = tpu.dynamic_rotate %arg7 by %c127_i32_38 dim 1 : vector<32x128xf32>, i32 -> vector<32x128xf32>
      %89 = arith.select %18, %88, %arg7 : vector<32x128xi1>, vector<32x128xf32>
      %c1_i32_39 = arith.constant 1 : i32
      %90 = tpu.dynamic_rotate %arg7 by %c1_i32_39 dim 1 : vector<32x128xf32>, i32 -> vector<32x128xf32>
      %91 = arith.select %22, %90, %arg7 : vector<32x128xi1>, vector<32x128xf32>
      %92 = arith.minimumf %89, %91 : vector<32x128xf32>
      %93 = arith.minimumf %arg7, %92 : vector<32x128xf32>
      %94 = arith.minimumf %87, %93 : vector<32x128xf32>
      %c31_i32_40 = arith.constant 31 : i32
      %95 = tpu.dynamic_rotate %94 by %c31_i32_40 dim 0 : vector<32x128xf32>, i32 -> vector<32x128xf32>
      %96 = arith.select %10, %95, %94 : vector<32x128xi1>, vector<32x128xf32>
      %c1_i32_41 = arith.constant 1 : i32
      %97 = tpu.dynamic_rotate %94 by %c1_i32_41 dim 0 : vector<32x128xf32>, i32 -> vector<32x128xf32>
      %98 = arith.select %14, %97, %94 : vector<32x128xi1>, vector<32x128xf32>
      %99 = arith.maximumf %96, %98 : vector<32x128xf32>
      %100 = arith.maximumf %94, %99 : vector<32x128xf32>
      %c127_i32_42 = arith.constant 127 : i32
      %101 = tpu.dynamic_rotate %100 by %c127_i32_42 dim 1 : vector<32x128xf32>, i32 -> vector<32x128xf32>
      %102 = arith.select %18, %101, %100 : vector<32x128xi1>, vector<32x128xf32>
      %c1_i32_43 = arith.constant 1 : i32
      %103 = tpu.dynamic_rotate %100 by %c1_i32_43 dim 1 : vector<32x128xf32>, i32 -> vector<32x128xf32>
      %104 = arith.select %22, %103, %100 : vector<32x128xi1>, vector<32x128xf32>
      %105 = arith.maximumf %102, %104 : vector<32x128xf32>
      %106 = arith.maximumf %100, %105 : vector<32x128xf32>
      %107 = arith.subf %arg7, %106 : vector<32x128xf32>
      %cst_44 = arith.constant 0.000000e+00 : f32
      %108 = vector.broadcast %cst_44 : f32 to vector<32x128xf32>
      %109 = arith.maximumf %107, %108 : vector<32x128xf32>
      %110 = arith.mulf %arg6, %109 : vector<32x128xf32>
      %111 = arith.subf %109, %110 : vector<32x128xf32>
      %cst_45 = arith.constant 0.000000e+00 : f32
      %112 = vector.broadcast %cst_45 : f32 to vector<32x128xf32>
      %113 = arith.maximumf %111, %112 : vector<32x128xf32>
      %114 = arith.addf %arg6, %113 : vector<32x128xf32>
      scf.yield %114, %94 : vector<32x128xf32>, vector<32x128xf32>
    }
    %53 = vector.extract_strided_slice %4 {offsets = [0, 0], sizes = [16, 128], strides = [1, 1]} : vector<32x128xf32> to vector<16x128xf32>
    %54 = vector.extract_strided_slice %4 {offsets = [16, 0], sizes = [16, 128], strides = [1, 1]} : vector<32x128xf32> to vector<16x128xf32>
    %55 = vector.extract_strided_slice %52#0 {offsets = [0, 0], sizes = [16, 128], strides = [1, 1]} : vector<32x128xf32> to vector<16x128xf32>
    %56 = vector.extract_strided_slice %52#0 {offsets = [16, 0], sizes = [16, 128], strides = [1, 1]} : vector<32x128xf32> to vector<16x128xf32>
    %c0_17 = arith.constant 0 : index
    %c0_18 = arith.constant 0 : index
    %57 = vector.load %arg4[%c0_17, %c0_18] : memref<8x128xf32, #tpu.memory_space<vmem>>, vector<1x128xf32>
    %58 = arith.mulf %55, %54 : vector<16x128xf32>
    %cst_19 = arith.constant dense<0.000000e+00> : vector<128xf32>
    %59 = vector.multi_reduction <add>, %58, %cst_19 [0] : vector<16x128xf32> to vector<128xf32>
    %60 = vector.shape_cast %59 : vector<128xf32> to vector<1x128xf32>
    %61 = arith.addf %57, %60 : vector<1x128xf32>
    %c0_20 = arith.constant 0 : index
    %c0_21 = arith.constant 0 : index
    %62 = vector.load %arg4[%c0_20, %c0_21] : memref<8x128xf32, #tpu.memory_space<vmem>>, vector<1x128xf32>
    tpu.vector_store %arg4[%c0_20, %c0_21], %61 {strides = array<i32>} : memref<8x128xf32, #tpu.memory_space<vmem>>, vector<1x128xf32>,
    %c1 = arith.constant 1 : index
    %c0_22 = arith.constant 0 : index
    %63 = vector.load %arg4[%c1, %c0_22] : memref<8x128xf32, #tpu.memory_space<vmem>>, vector<1x128xf32>
    %cst_23 = arith.constant dense<0.000000e+00> : vector<128xf32>
    %64 = vector.multi_reduction <add>, %55, %cst_23 [0] : vector<16x128xf32> to vector<128xf32>
    %65 = vector.shape_cast %64 : vector<128xf32> to vector<1x128xf32>
    %66 = arith.addf %63, %65 : vector<1x128xf32>
    %c1_24 = arith.constant 1 : index
    %c0_25 = arith.constant 0 : index
    %67 = vector.load %arg4[%c1_24, %c0_25] : memref<8x128xf32, #tpu.memory_space<vmem>>, vector<1x128xf32>
    tpu.vector_store %arg4[%c1_24, %c0_25], %66 {strides = array<i32>} : memref<8x128xf32, #tpu.memory_space<vmem>>, vector<1x128xf32>,
    %c2 = arith.constant 2 : index
    %c0_26 = arith.constant 0 : index
    %68 = vector.load %arg4[%c2, %c0_26] : memref<8x128xf32, #tpu.memory_space<vmem>>, vector<1x128xf32>
    %69 = arith.mulf %56, %53 : vector<16x128xf32>
    %cst_27 = arith.constant dense<0.000000e+00> : vector<128xf32>
    %70 = vector.multi_reduction <add>, %69, %cst_27 [0] : vector<16x128xf32> to vector<128xf32>
    %71 = vector.shape_cast %70 : vector<128xf32> to vector<1x128xf32>
    %72 = arith.addf %68, %71 : vector<1x128xf32>
    %c2_28 = arith.constant 2 : index
    %c0_29 = arith.constant 0 : index
    %73 = vector.load %arg4[%c2_28, %c0_29] : memref<8x128xf32, #tpu.memory_space<vmem>>, vector<1x128xf32>
    tpu.vector_store %arg4[%c2_28, %c0_29], %72 {strides = array<i32>} : memref<8x128xf32, #tpu.memory_space<vmem>>, vector<1x128xf32>,
    %c3 = arith.constant 3 : index
    %c0_30 = arith.constant 0 : index
    %74 = vector.load %arg4[%c3, %c0_30] : memref<8x128xf32, #tpu.memory_space<vmem>>, vector<1x128xf32>
    %cst_31 = arith.constant dense<0.000000e+00> : vector<128xf32>
    %75 = vector.multi_reduction <add>, %56, %cst_31 [0] : vector<16x128xf32> to vector<128xf32>
    %76 = vector.shape_cast %75 : vector<128xf32> to vector<1x128xf32>
    %77 = arith.addf %74, %76 : vector<1x128xf32>
    %c3_32 = arith.constant 3 : index
    %c0_33 = arith.constant 0 : index
    %78 = vector.load %arg4[%c3_32, %c0_33] : memref<8x128xf32, #tpu.memory_space<vmem>>, vector<1x128xf32>
    tpu.vector_store %arg4[%c3_32, %c0_33], %77 {strides = array<i32>} : memref<8x128xf32, #tpu.memory_space<vmem>>, vector<1x128xf32>,
    %c0_i32_34 = arith.constant 0 : i32
    %79 = arith.cmpi eq, %arg1, %c0_i32_34 : i32
    %80 = arith.extui %79 : i1 to i32
    %c0_i32_35 = arith.constant 0 : i32
    %81 = arith.cmpi ne, %80, %c0_i32_35 : i32
    scf.if %81 {
      %c0_36 = arith.constant 0 : index
      %c0_37 = arith.constant 0 : index
      %82 = vector.load %arg4[%c0_36, %c0_37] : memref<8x128xf32, #tpu.memory_space<vmem>>, vector<8x128xf32>
      %83 = vector.extract_strided_slice %82 {offsets = [0, 0], sizes = [1, 128], strides = [1, 1]} : vector<8x128xf32> to vector<1x128xf32>
      %84 = vector.shape_cast %83 : vector<1x128xf32> to vector<1x1x128xf32>
      %cst_38 = arith.constant dense<0.000000e+00> : vector<1xf32>
      %85 = vector.multi_reduction <add>, %84, %cst_38 [1, 2] : vector<1x1x128xf32> to vector<1xf32>
      %86 = vector.shape_cast %85 : vector<1xf32> to vector<1x1x1xf32>
      %87 = vector.extract %86[0, 0, 0] : f32 from vector<1x1x1xf32>
      %88 = vector.extract_strided_slice %82 {offsets = [1, 0], sizes = [1, 128], strides = [1, 1]} : vector<8x128xf32> to vector<1x128xf32>
      %89 = vector.shape_cast %88 : vector<1x128xf32> to vector<1x1x128xf32>
      %cst_39 = arith.constant dense<0.000000e+00> : vector<1xf32>
      %90 = vector.multi_reduction <add>, %89, %cst_39 [1, 2] : vector<1x1x128xf32> to vector<1xf32>
      %91 = vector.shape_cast %90 : vector<1xf32> to vector<1x1x1xf32>
      %92 = vector.extract %91[0, 0, 0] : f32 from vector<1x1x1xf32>
      %93 = vector.extract_strided_slice %82 {offsets = [2, 0], sizes = [1, 128], strides = [1, 1]} : vector<8x128xf32> to vector<1x128xf32>
      %94 = vector.shape_cast %93 : vector<1x128xf32> to vector<1x1x128xf32>
      %cst_40 = arith.constant dense<0.000000e+00> : vector<1xf32>
      %95 = vector.multi_reduction <add>, %94, %cst_40 [1, 2] : vector<1x1x128xf32> to vector<1xf32>
      %96 = vector.shape_cast %95 : vector<1xf32> to vector<1x1x1xf32>
      %97 = vector.extract %96[0, 0, 0] : f32 from vector<1x1x1xf32>
      %98 = vector.extract_strided_slice %82 {offsets = [3, 0], sizes = [1, 128], strides = [1, 1]} : vector<8x128xf32> to vector<1x128xf32>
      %99 = vector.shape_cast %98 : vector<1x128xf32> to vector<1x1x128xf32>
      %cst_41 = arith.constant dense<0.000000e+00> : vector<1xf32>
      %100 = vector.multi_reduction <add>, %99, %cst_41 [1, 2] : vector<1x1x128xf32> to vector<1xf32>
      %101 = vector.shape_cast %100 : vector<1xf32> to vector<1x1x1xf32>
      %102 = vector.extract %101[0, 0, 0] : f32 from vector<1x1x1xf32>
      %103 = tpu.iota {dimensions = array<i32: 2>} : vector<1x8x128xi32>
      %c0_i32_42 = arith.constant 0 : i32
      %104 = vector.broadcast %c0_i32_42 : i32 to vector<1x8x128xi32>
      %105 = arith.cmpi eq, %103, %104 : vector<1x8x128xi32>
      %cst_43 = arith.constant 0.000000e+00 : f32
      %106 = vector.broadcast %87 : f32 to vector<1x8x128xf32>
      %107 = vector.broadcast %cst_43 : f32 to vector<1x8x128xf32>
      %108 = arith.select %105, %106, %107 : vector<1x8x128xi1>, vector<1x8x128xf32>
      %c1_i32_44 = arith.constant 1 : i32
      %109 = vector.broadcast %c1_i32_44 : i32 to vector<1x8x128xi32>
      %110 = arith.cmpi eq, %103, %109 : vector<1x8x128xi32>
      %111 = vector.broadcast %92 : f32 to vector<1x8x128xf32>
      %112 = arith.select %110, %111, %108 : vector<1x8x128xi1>, vector<1x8x128xf32>
      %c2_i32 = arith.constant 2 : i32
      %113 = vector.broadcast %c2_i32 : i32 to vector<1x8x128xi32>
      %114 = arith.cmpi eq, %103, %113 : vector<1x8x128xi32>
      %115 = vector.broadcast %97 : f32 to vector<1x8x128xf32>
      %116 = arith.select %114, %115, %112 : vector<1x8x128xi1>, vector<1x8x128xf32>
      %c3_i32 = arith.constant 3 : i32
      %117 = vector.broadcast %c3_i32 : i32 to vector<1x8x128xi32>
      %118 = arith.cmpi eq, %103, %117 : vector<1x8x128xi32>
      %119 = vector.broadcast %102 : f32 to vector<1x8x128xf32>
      %120 = arith.select %118, %119, %116 : vector<1x8x128xi1>, vector<1x8x128xf32>
      %c0_45 = arith.constant 0 : index
      %c0_46 = arith.constant 0 : index
      %c0_47 = arith.constant 0 : index
      %121 = vector.load %arg3[%c0_45, %c0_46, %c0_47] : memref<1x8x128xf32, #tpu.memory_space<vmem>>, vector<1x8x128xf32>
      tpu.vector_store %arg3[%c0_45, %c0_46, %c0_47], %120 {strides = array<i32>} : memref<1x8x128xf32, #tpu.memory_space<vmem>>, vector<1x8x128xf32>,
    } else {
    }
    return
  }
  func.func @transform_0(%arg0: i32, %arg1: i32) -> (i32, i32, i32) {
    %c1_i32 = arith.constant 1 : i32
    %0 = arith.muli %arg0, %c1_i32 : i32
    %1 = arith.addi %0, %arg1 : i32
    %c0_i32 = arith.constant 0 : i32
    %c0_i32_0 = arith.constant 0 : i32
    %c0_i32_1 = arith.constant 0 : i32
    return %1, %c0_i32, %c0_i32_0 : i32, i32, i32
  }
  func.func @transform_1(%arg0: i32, %arg1: i32) -> (i32, i32, i32) {
    %c0_i32 = arith.constant 0 : i32
    %c0_i32_0 = arith.constant 0 : i32
    %c0_i32_1 = arith.constant 0 : i32
    return %arg0, %c0_i32, %c0_i32_0 : i32, i32, i32
  }
}

</mosaic_0001>

<llo_original>
// kernel: tpu_custom_call.1
$region0: #{tpu_custom_call.1}
  #allocation0 [shape = 'u32[]', space=smem, size = 0x4, offset = 0x4, fixed_abs, tag = 'smem constant byte address 0x4 - core index']
  #allocation1 [shape = 'u32[144,128]{1,0:T(1,128)}', space=vmem, size = 0x12000, scoped, tag = 'internal scratch']
  #allocation2 [shape = 'f32[8,128]{1,0:T(8,128)}', space=vmem, size = 0x1000, scoped, tag = 'scratch operand']
  %s0 = inlined_call_operand.hbm [shape: f32[1,32,128], index: 0, kind: input, shape index: {}]
  %s1 = inlined_call_operand.hbm [shape: f32[1,8,128], index: 1, kind: output, shape index: {}]
  %s2 = sld [smem:[#allocation0]]
  $region33: #{tpu_custom_call.1} parent=0
    _
  %s4 = ssub.s32 1, %s2
  %s5 = scalar_select 0, %s4, %s2
  $region1: #{tpu_custom_call.1} parent=0
    #allocation3 [shape = 'u8[16384]{0}', space=vmem, size = 0x4000, scoped, tag = 'input window, operand 0, single buffered']
    #allocation4 [shape = 's32[1]{0}', space=sflag, size = 0x4, scoped, tag = 'scoped memory for tpu_custom_call.1']
    #allocation5 [shape = 's32[1]{0}', space=sflag, size = 0x4, scoped, tag = 'scoped memory for tpu_custom_call.1']
    #allocation6 [shape = 'u8[4096]{0}', space=vmem, size = 0x1000, scoped, tag = 'output window, operand 0, single buffered']
    %6 = vsyncpa [#allocation4], 0
    %7 = vsyncpa [#allocation5], 0
    // Predicated region
    $region2: #{tpu_custom_call.1} parent=1 // pred_check
      _
    $region3: #{tpu_custom_call.1} parent=1 // pred_check_branch
      %9 = sbr.rel (0) target = $region5
    $region4: #{tpu_custom_call.1} parent=1 // pred_region
      %s10 = sadd.s32 0, 0
      %s12 = ssub.s32 512, 512
      %13 = vsyncadd [#allocation4], %s12
      %s14 = smul.addr %s10, 4
      %s15 = smul.addr %s14, 128
      %s16 = scalar_lea.hbm %s0, %s15
      %s17 = sshll.u32 [#allocation3], 4
      %s18 = int_to_ptr.vmem [resolvable:$true] %s17
      %23 = dma.hbm_to_vmem [thread:$0]  %s16, 512, %s18, [#allocation4], 128, 128, 8
    $region5: #{tpu_custom_call.1} parent=1 // pred_fallthru
      _
    // Predicated region
    $region6: #{tpu_custom_call.1} parent=1 // pred_check
      _
    $region7: #{tpu_custom_call.1} parent=1 // pred_check_branch
      %25 = sbr.rel (0) target = $region9
    $region8: #{tpu_custom_call.1} parent=1 // pred_region
      %26 = dma.done [#allocation4], 512
    $region9: #{tpu_custom_call.1} parent=1 // pred_fallthru
      _
    %s27 = sadd.s32 0, 0
    %p28 = scmp.eq.s32.totalorder 0, 0
    // Predicated region
    $region10: #{tpu_custom_call.1} parent=1 // pred_check
      %p29 = pneg %p28
    $region11: #{tpu_custom_call.1} parent=1 // pred_check_branch
      %31 = sbr.rel (%p29) target = $region13
    $region12: #{tpu_custom_call.1} parent=1 // pred_region
      %32 = vst [vmem:[#allocation2] sm:$0xff] 0.0
    $region13: #{tpu_custom_call.1} parent=1 // pred_fallthru
      _
    %v33 = vld [vmem:[#allocation3] sm:$0xff]
    %v34 = vld [vmem:[#allocation3 + $0x8] sm:$0xff]
    %v35 = vld [vmem:[#allocation3 + $0x10] sm:$0xff]
    %v36 = vld [vmem:[#allocation3 + $0x18] sm:$0xff]
    %v37 = vlaneseq
    %v38 = vshrl.u32 %v37, 7
    %v39 = vadd.s32 %v38, 8
    %v40 = vadd.s32 %v38, 16
    %v41 = vadd.s32 %v38, 24
    %v42 = vlaneseq
    %v43 = vand.u32 %v42, 127
    %v44 = vand.u32 %v38, 15
    %v45 = vand.u32 %v39, 15
    %v46 = vand.u32 %v40, 15
    %v47 = vand.u32 %v41, 15
    %vm48 = vcmp.ne.s32.totalorder %v44, 15
    %vm49 = vcmp.ne.s32.totalorder %v45, 15
    %vm50 = vcmp.ne.s32.totalorder %v46, 15
    %vm51 = vcmp.ne.s32.totalorder %v47, 15
    %vm52 = vcmp.ne.s32.totalorder %v44, 0
    %vm53 = vcmp.ne.s32.totalorder %v45, 0
    %vm54 = vcmp.ne.s32.totalorder %v46, 0
    %vm55 = vcmp.ne.s32.totalorder %v47, 0
    %v56 = vand.u32 %v43, 15
    %vm57 = vcmp.ne.s32.totalorder %v56, 15
    %vm58 = vcmp.ne.s32.totalorder %v56, 0
    %v59 = vrot.slane %v33, 1
    %v60 = vrot.slane %v34, 1
    %v61 = vrot.slane %v35, 1
    %v62 = vrot.slane %v36, 1
    %vm63 = vcmp.lt.s32.totalorder %v38, 7
    %v64 = vsel %vm63, %v61, %v62
    %v65 = vsel %vm63, %v60, %v61
    %v66 = vsel %vm63, %v59, %v60
    %v67 = vsel %vm63, %v62, %v59
    %v68 = vsel %vm48, %v66, %v33
    %v69 = vsel %vm49, %v65, %v34
    %v70 = vsel %vm50, %v64, %v35
    %v71 = vsel %vm51, %v67, %v36
    %v72 = vrot.slane %v33, 7
    %v73 = vrot.slane %v34, 7
    %v74 = vrot.slane %v35, 7
    %v75 = vrot.slane %v36, 7
    %vm76 = vcmp.lt.s32.totalorder %v38, 1
    %v77 = vsel %vm76, %v74, %v75
    %v78 = vsel %vm76, %v73, %v74
    %v79 = vsel %vm76, %v72, %v73
    %v80 = vsel %vm76, %v75, %v72
    %v81 = vsel %vm52, %v80, %v33
    %v82 = vsel %vm53, %v79, %v34
    %v83 = vsel %vm54, %v78, %v35
    %v84 = vsel %vm55, %v77, %v36
    %v85 = vmin.f32 %v68, %v81
    %v86 = vmin.f32 %v69, %v82
    %v87 = vmin.f32 %v70, %v83
    %v88 = vmin.f32 %v71, %v84
    %v89 = vmin.f32 %v33, %v85
    %v90 = vmin.f32 %v34, %v86
    %v91 = vmin.f32 %v35, %v87
    %v92 = vmin.f32 %v36, %v88
    %93 = vrot.lane.b32.xlu0 %v33, 127
    %v94 = vpop.permute.xlu0 %93
    %95 = vrot.lane.b32.xlu0 %v34, 127
    %v96 = vpop.permute.xlu0 %95
    %97 = vrot.lane.b32.xlu0 %v35, 127
    %v98 = vpop.permute.xlu0 %97
    %99 = vrot.lane.b32.xlu0 %v36, 127
    %v100 = vpop.permute.xlu0 %99
    %v101 = vsel %vm57, %v94, %v33
    %v102 = vsel %vm57, %v96, %v34
    %v103 = vsel %vm57, %v98, %v35
    %v104 = vsel %vm57, %v100, %v36
    %105 = vrot.lane.b32.xlu0 %v33, 1
    %v106 = vpop.permute.xlu0 %105
    %107 = vrot.lane.b32.xlu0 %v34, 1
    %v108 = vpop.permute.xlu0 %107
    %109 = vrot.lane.b32.xlu0 %v35, 1
    %v110 = vpop.permute.xlu0 %109
    %111 = vrot.lane.b32.xlu0 %v36, 1
    %v112 = vpop.permute.xlu0 %111
    %v113 = vsel %vm58, %v106, %v33
    %v114 = vsel %vm58, %v108, %v34
    %v115 = vsel %vm58, %v110, %v35
    %v116 = vsel %vm58, %v112, %v36
    %v117 = vmin.f32 %v101, %v113
    %v118 = vmin.f32 %v102, %v114
    %v119 = vmin.f32 %v103, %v115
    %v120 = vmin.f32 %v104, %v116
    %v121 = vmin.f32 %v33, %v117
    %v122 = vmin.f32 %v34, %v118
    %v123 = vmin.f32 %v35, %v119
    %v124 = vmin.f32 %v36, %v120
    %v125 = vmin.f32 %v89, %v121
    %v126 = vmin.f32 %v90, %v122
    %v127 = vmin.f32 %v91, %v123
    %v128 = vmin.f32 %v92, %v124
    %v129 = vrot.slane %v125, 1
    %v130 = vrot.slane %v126, 1
    %v131 = vrot.slane %v127, 1
    %v132 = vrot.slane %v128, 1
    %v133 = vsel %vm63, %v131, %v132
    %v134 = vsel %vm63, %v130, %v131
    %v135 = vsel %vm63, %v129, %v130
    %v136 = vsel %vm63, %v132, %v129
    %v137 = vsel %vm48, %v135, %v125
    %v138 = vsel %vm49, %v134, %v126
    %v139 = vsel %vm50, %v133, %v127
    %v140 = vsel %vm51, %v136, %v128
    %v141 = vrot.slane %v125, 7
    %v142 = vrot.slane %v126, 7
    %v143 = vrot.slane %v127, 7
    %v144 = vrot.slane %v128, 7
    %v145 = vsel %vm76, %v143, %v144
    %v146 = vsel %vm76, %v142, %v143
    %v147 = vsel %vm76, %v141, %v142
    %v148 = vsel %vm76, %v144, %v141
    %v149 = vsel %vm52, %v148, %v125
    %v150 = vsel %vm53, %v147, %v126
    %v151 = vsel %vm54, %v146, %v127
    %v152 = vsel %vm55, %v145, %v128
    %v153 = vmax.f32 %v137, %v149
    %v154 = vmax.f32 %v138, %v150
    %v155 = vmax.f32 %v139, %v151
    %v156 = vmax.f32 %v140, %v152
    %v157 = vmax.f32 %v125, %v153
    %v158 = vmax.f32 %v126, %v154
    %v159 = vmax.f32 %v127, %v155
    %v160 = vmax.f32 %v128, %v156
    %161 = vrot.lane.b32.xlu0 %v157, 127
    %v162 = vpop.permute.xlu0 %161
    %163 = vrot.lane.b32.xlu0 %v158, 127
    %v164 = vpop.permute.xlu0 %163
    %165 = vrot.lane.b32.xlu0 %v159, 127
    %v166 = vpop.permute.xlu0 %165
    %167 = vrot.lane.b32.xlu0 %v160, 127
    %v168 = vpop.permute.xlu0 %167
    %v169 = vsel %vm57, %v162, %v157
    %v170 = vsel %vm57, %v164, %v158
    %v171 = vsel %vm57, %v166, %v159
    %v172 = vsel %vm57, %v168, %v160
    %173 = vrot.lane.b32.xlu0 %v157, 1
    %v174 = vpop.permute.xlu0 %173
    %175 = vrot.lane.b32.xlu0 %v158, 1
    %v176 = vpop.permute.xlu0 %175
    %177 = vrot.lane.b32.xlu0 %v159, 1
    %v178 = vpop.permute.xlu0 %177
    %179 = vrot.lane.b32.xlu0 %v160, 1
    %v180 = vpop.permute.xlu0 %179
    %v181 = vsel %vm58, %v174, %v157
    %v182 = vsel %vm58, %v176, %v158
    %v183 = vsel %vm58, %v178, %v159
    %v184 = vsel %vm58, %v180, %v160
    %v185 = vmax.f32 %v169, %v181
    %v186 = vmax.f32 %v170, %v182
    %v187 = vmax.f32 %v171, %v183
    %v188 = vmax.f32 %v172, %v184
    %v189 = vmax.f32 %v157, %v185
    %v190 = vmax.f32 %v158, %v186
    %v191 = vmax.f32 %v159, %v187
    %v192 = vmax.f32 %v160, %v188
    %v193 = vsub.f32 %v33, %v189
    %v194 = vsub.f32 %v34, %v190
    %v195 = vsub.f32 %v35, %v191
    %v196 = vsub.f32 %v36, %v192
    %v197 = vmax.f32 %v193, 0.0
    %v198 = vmax.f32 %v194, 0.0
    %v199 = vmax.f32 %v195, 0.0
    %v200 = vmax.f32 %v196, 0.0
    loop: start=0, step=1, limit=20
    $region14: #{tpu_custom_call.1} parent=1 // loop_pre_header
      _
    $region15: #{tpu_custom_call.1} parent=1 // loop_header
      %s202 = sphi 0, %s206
      %p203 = scmp.ge.s32.totalorder %s202, 20
      %v207 = vphi %v197, %v367
      %v208 = vphi %v198, %v368
      %v209 = vphi %v199, %v369
      %v210 = vphi %v200, %v370
      %v211 = vphi %v125, %v279
      %v212 = vphi %v126, %v280
      %v213 = vphi %v127, %v281
      %v214 = vphi %v128, %v282
    $region16: #{tpu_custom_call.1} parent=1 // loop_header_branch
      %205 = sbr.rel (%p203) target = $region20
    $region17: #{tpu_custom_call.1} parent=1 // loop_body
      %v215 = vrot.slane %v211, 1
      %v216 = vrot.slane %v212, 1
      %v217 = vrot.slane %v213, 1
      %v218 = vrot.slane %v214, 1
      %v219 = vsel %vm63, %v217, %v218
      %v220 = vsel %vm63, %v216, %v217
      %v221 = vsel %vm63, %v215, %v216
      %v222 = vsel %vm63, %v218, %v215
      %v223 = vsel %vm48, %v221, %v211
      %v224 = vsel %vm49, %v220, %v212
      %v225 = vsel %vm50, %v219, %v213
      %v226 = vsel %vm51, %v222, %v214
      %v227 = vrot.slane %v211, 7
      %v228 = vrot.slane %v212, 7
      %v229 = vrot.slane %v213, 7
      %v230 = vrot.slane %v214, 7
      %v231 = vsel %vm76, %v229, %v230
      %v232 = vsel %vm76, %v228, %v229
      %v233 = vsel %vm76, %v227, %v228
      %v234 = vsel %vm76, %v230, %v227
      %v235 = vsel %vm52, %v234, %v211
      %v236 = vsel %vm53, %v233, %v212
      %v237 = vsel %vm54, %v232, %v213
      %v238 = vsel %vm55, %v231, %v214
      %v239 = vmin.f32 %v223, %v235
      %v240 = vmin.f32 %v224, %v236
      %v241 = vmin.f32 %v225, %v237
      %v242 = vmin.f32 %v226, %v238
      %v243 = vmin.f32 %v211, %v239
      %v244 = vmin.f32 %v212, %v240
      %v245 = vmin.f32 %v213, %v241
      %v246 = vmin.f32 %v214, %v242
      %247 = vrot.lane.b32.xlu0 %v211, 127
      %v248 = vpop.permute.xlu0 %247
      %249 = vrot.lane.b32.xlu0 %v212, 127
      %v250 = vpop.permute.xlu0 %249
      %251 = vrot.lane.b32.xlu0 %v213, 127
      %v252 = vpop.permute.xlu0 %251
      %253 = vrot.lane.b32.xlu0 %v214, 127
      %v254 = vpop.permute.xlu0 %253
      %v255 = vsel %vm57, %v248, %v211
      %v256 = vsel %vm57, %v250, %v212
      %v257 = vsel %vm57, %v252, %v213
      %v258 = vsel %vm57, %v254, %v214
      %259 = vrot.lane.b32.xlu0 %v211, 1
      %v260 = vpop.permute.xlu0 %259
      %261 = vrot.lane.b32.xlu0 %v212, 1
      %v262 = vpop.permute.xlu0 %261
      %263 = vrot.lane.b32.xlu0 %v213, 1
      %v264 = vpop.permute.xlu0 %263
      %265 = vrot.lane.b32.xlu0 %v214, 1
      %v266 = vpop.permute.xlu0 %265
      %v267 = vsel %vm58, %v260, %v211
      %v268 = vsel %vm58, %v262, %v212
      %v269 = vsel %vm58, %v264, %v213
      %v270 = vsel %vm58, %v266, %v214
      %v271 = vmin.f32 %v255, %v267
      %v272 = vmin.f32 %v256, %v268
      %v273 = vmin.f32 %v257, %v269
      %v274 = vmin.f32 %v258, %v270
      %v275 = vmin.f32 %v211, %v271
      %v276 = vmin.f32 %v212, %v272
      %v277 = vmin.f32 %v213, %v273
      %v278 = vmin.f32 %v214, %v274
      %v279 = vmin.f32 %v243, %v275
      %v280 = vmin.f32 %v244, %v276
      %v281 = vmin.f32 %v245, %v277
      %v282 = vmin.f32 %v246, %v278
      %v283 = vrot.slane %v279, 1
      %v284 = vrot.slane %v280, 1
      %v285 = vrot.slane %v281, 1
      %v286 = vrot.slane %v282, 1
      %v287 = vsel %vm63, %v285, %v286
      %v288 = vsel %vm63, %v284, %v285
      %v289 = vsel %vm63, %v283, %v284
      %v290 = vsel %vm63, %v286, %v283
      %v291 = vsel %vm48, %v289, %v279
      %v292 = vsel %vm49, %v288, %v280
      %v293 = vsel %vm50, %v287, %v281
      %v294 = vsel %vm51, %v290, %v282
      %v295 = vrot.slane %v279, 7
      %v296 = vrot.slane %v280, 7
      %v297 = vrot.slane %v281, 7
      %v298 = vrot.slane %v282, 7
      %v299 = vsel %vm76, %v297, %v298
      %v300 = vsel %vm76, %v296, %v297
      %v301 = vsel %vm76, %v295, %v296
      %v302 = vsel %vm76, %v298, %v295
      %v303 = vsel %vm52, %v302, %v279
      %v304 = vsel %vm53, %v301, %v280
      %v305 = vsel %vm54, %v300, %v281
      %v306 = vsel %vm55, %v299, %v282
      %v307 = vmax.f32 %v291, %v303
      %v308 = vmax.f32 %v292, %v304
      %v309 = vmax.f32 %v293, %v305
      %v310 = vmax.f32 %v294, %v306
      %v311 = vmax.f32 %v279, %v307
      %v312 = vmax.f32 %v280, %v308
      %v313 = vmax.f32 %v281, %v309
      %v314 = vmax.f32 %v282, %v310
      %315 = vrot.lane.b32.xlu0 %v311, 127
      %v316 = vpop.permute.xlu0 %315
      %317 = vrot.lane.b32.xlu0 %v312, 127
      %v318 = vpop.permute.xlu0 %317
      %319 = vrot.lane.b32.xlu0 %v313, 127
      %v320 = vpop.permute.xlu0 %319
      %321 = vrot.lane.b32.xlu0 %v314, 127
      %v322 = vpop.permute.xlu0 %321
      %v323 = vsel %vm57, %v316, %v311
      %v324 = vsel %vm57, %v318, %v312
      %v325 = vsel %vm57, %v320, %v313
      %v326 = vsel %vm57, %v322, %v314
      %327 = vrot.lane.b32.xlu0 %v311, 1
      %v328 = vpop.permute.xlu0 %327
      %329 = vrot.lane.b32.xlu0 %v312, 1
      %v330 = vpop.permute.xlu0 %329
      %331 = vrot.lane.b32.xlu0 %v313, 1
      %v332 = vpop.permute.xlu0 %331
      %333 = vrot.lane.b32.xlu0 %v314, 1
      %v334 = vpop.permute.xlu0 %333
      %v335 = vsel %vm58, %v328, %v311
      %v336 = vsel %vm58, %v330, %v312
      %v337 = vsel %vm58, %v332, %v313
      %v338 = vsel %vm58, %v334, %v314
      %v339 = vmax.f32 %v323, %v335
      %v340 = vmax.f32 %v324, %v336
      %v341 = vmax.f32 %v325, %v337
      %v342 = vmax.f32 %v326, %v338
      %v343 = vmax.f32 %v311, %v339
      %v344 = vmax.f32 %v312, %v340
      %v345 = vmax.f32 %v313, %v341
      %v346 = vmax.f32 %v314, %v342
      %v347 = vsub.f32 %v211, %v343
      %v348 = vsub.f32 %v212, %v344
      %v349 = vsub.f32 %v213, %v345
      %v350 = vsub.f32 %v214, %v346
      %v351 = vmax.f32 %v347, 0.0
      %v352 = vmax.f32 %v348, 0.0
      %v353 = vmax.f32 %v349, 0.0
      %v354 = vmax.f32 %v350, 0.0
      %v355 = vmul.f32 %v207, %v351
      %v356 = vmul.f32 %v208, %v352
      %v357 = vmul.f32 %v209, %v353
      %v358 = vmul.f32 %v210, %v354
      %v359 = vsub.f32 %v351, %v355
      %v360 = vsub.f32 %v352, %v356
      %v361 = vsub.f32 %v353, %v357
      %v362 = vsub.f32 %v354, %v358
      %v363 = vmax.f32 %v359, 0.0
      %v364 = vmax.f32 %v360, 0.0
      %v365 = vmax.f32 %v361, 0.0
      %v366 = vmax.f32 %v362, 0.0
      %v367 = vadd.f32 %v207, %v363
      %v368 = vadd.f32 %v208, %v364
      %v369 = vadd.f32 %v209, %v365
      %v370 = vadd.f32 %v210, %v366
    $region18: #{tpu_custom_call.1} parent=1 // loop_footer
      %s206 = sadd.s32 1, %s202
    $region19: #{tpu_custom_call.1} parent=1 // loop_footer_branch
      %201 = sbr.rel target = $region15
    $region20: #{tpu_custom_call.1} parent=1 // loop_exit
      _
    %v371 = vld [vmem:[#allocation2] sm:$0x1]
    %v372 = vmul.f32 %v207, %v35
    %v373 = vmul.f32 %v208, %v36
    %v374 = vadd.f32 %v372, %v373
    %v375 = vrot.slane %v374, 4
    %v376 = vadd.f32 %v374, %v375
    %v377 = vrot.slane %v376, 2
    %v378 = vadd.f32 %v376, %v377
    %v379 = vrot.slane %v378, 1
    %v380 = vadd.f32 %v378, %v379
    %v381 = vadd.f32 %v371, %v380
    %382 = vst [vmem:[#allocation2] sm:$0x1] %v381
    %v383 = vld [vmem:[#allocation2 + $0x1] sm:$0x1]
    %v384 = vadd.f32 %v207, %v208
    %v385 = vrot.slane %v384, 4
    %v386 = vadd.f32 %v384, %v385
    %v387 = vrot.slane %v386, 2
    %v388 = vadd.f32 %v386, %v387
    %v389 = vrot.slane %v388, 1
    %v390 = vadd.f32 %v388, %v389
    %v391 = vadd.f32 %v383, %v390
    %392 = vst [vmem:[#allocation2 + $0x1] sm:$0x1] %v391
    %v393 = vld [vmem:[#allocation2 + $0x2] sm:$0x1]
    %v394 = vmul.f32 %v209, %v33
    %v395 = vmul.f32 %v210, %v34
    %v396 = vadd.f32 %v394, %v395
    %v397 = vrot.slane %v396, 4
    %v398 = vadd.f32 %v396, %v397
    %v399 = vrot.slane %v398, 2
    %v400 = vadd.f32 %v398, %v399
    %v401 = vrot.slane %v400, 1
    %v402 = vadd.f32 %v400, %v401
    %v403 = vadd.f32 %v393, %v402
    %404 = vst [vmem:[#allocation2 + $0x2] sm:$0x1] %v403
    %v405 = vld [vmem:[#allocation2 + $0x3] sm:$0x1]
    %v406 = vadd.f32 %v209, %v210
    %v407 = vrot.slane %v406, 4
    %v408 = vadd.f32 %v406, %v407
    %v409 = vrot.slane %v408, 2
    %v410 = vadd.f32 %v408, %v409
    %v411 = vrot.slane %v410, 1
    %v412 = vadd.f32 %v410, %v411
    %v413 = vadd.f32 %v405, %v412
    %414 = vst [vmem:[#allocation2 + $0x3] sm:$0x1] %v413
    // Predicated region
    $region21: #{tpu_custom_call.1} parent=1 // pred_check
      %p415 = pneg %p28
    $region22: #{tpu_custom_call.1} parent=1 // pred_check_branch
      %417 = sbr.rel (%p415) target = $region24
    $region23: #{tpu_custom_call.1} parent=1 // pred_region
      %v418 = vld [vmem:[#allocation2] sm:$0xff]
      %vm419 = vcmask 1040384
      %v420 = vsel %vm419, %v418, 0.0
      %421 = vadd.xlane.f32.xlu0 %v420
      %v422 = vpop.xlane.xlu0 %421
      %v423 = vrot.slane %v422, 4
      %v424 = vadd.f32 %v422, %v423
      %v425 = vrot.slane %v424, 2
      %v426 = vadd.f32 %v424, %v425
      %v427 = vrot.slane %v426, 1
      %v428 = vadd.f32 %v426, %v427
      %s429 = vtos %v428
      %v431 = vrot.slane %v418, 1
      %v433 = vsel %vm419, %v431, 0.0
      %434 = vadd.xlane.f32.xlu0 %v433
      %v435 = vpop.xlane.xlu0 %434
      %v436 = vrot.slane %v435, 4
      %v437 = vadd.f32 %v435, %v436
      %v438 = vrot.slane %v437, 2
      %v439 = vadd.f32 %v437, %v438
      %v440 = vrot.slane %v439, 1
      %v441 = vadd.f32 %v439, %v440
      %s442 = vtos %v441
      %v443 = vrot.slane %v418, 2
      %v445 = vsel %vm419, %v443, 0.0
      %446 = vadd.xlane.f32.xlu0 %v445
      %v447 = vpop.xlane.xlu0 %446
      %v448 = vrot.slane %v447, 4
      %v449 = vadd.f32 %v447, %v448
      %v450 = vrot.slane %v449, 2
      %v451 = vadd.f32 %v449, %v450
      %v452 = vrot.slane %v451, 1
      %v453 = vadd.f32 %v451, %v452
      %s454 = vtos %v453
      %v455 = vrot.slane %v418, 3
      %v457 = vsel %vm419, %v455, 0.0
      %458 = vadd.xlane.f32.xlu0 %v457
      %v459 = vpop.xlane.xlu0 %458
      %v460 = vrot.slane %v459, 4
      %v461 = vadd.f32 %v459, %v460
      %v462 = vrot.slane %v461, 2
      %v463 = vadd.f32 %v461, %v462
      %v464 = vrot.slane %v463, 1
      %v465 = vadd.f32 %v463, %v464
      %s466 = vtos %v465
      %vm467 = vcmp.eq.s32.totalorder %v43, 0
      %v468 = vstv %s429
      %v469 = vsel %vm467, %v468, 0.0
      %vm470 = vcmp.eq.s32.totalorder %v43, 1
      %v471 = vstv %s442
      %v472 = vsel %vm470, %v471, %v469
      %vm473 = vcmp.eq.s32.totalorder %v43, 2
      %v474 = vstv %s454
      %v475 = vsel %vm473, %v474, %v472
      %vm476 = vcmp.eq.s32.totalorder %v43, 3
      %v477 = vstv %s466
      %v478 = vsel %vm476, %v477, %v475
      %479 = vst [vmem:[#allocation6] sm:$0xff] %v478
    $region24: #{tpu_custom_call.1} parent=1 // pred_fallthru
      _
    // Predicated region
    $region25: #{tpu_custom_call.1} parent=1 // pred_check
      _
    $region26: #{tpu_custom_call.1} parent=1 // pred_check_branch
      %481 = sbr.rel (0) target = $region28
    $region27: #{tpu_custom_call.1} parent=1 // pred_region
      %s483 = ssub.s32 128, 128
      %484 = vsyncadd [#allocation5], %s483
      %s486 = sshll.u32 [#allocation6], 4
      %s487 = int_to_ptr.vmem [resolvable:$true] %s486
      %489 = dma.vmem_to_hbm [thread:$0]  %s487, 128, %s1, [#allocation5]
    $region28: #{tpu_custom_call.1} parent=1 // pred_fallthru
      _
    // Predicated region
    $region29: #{tpu_custom_call.1} parent=1 // pred_check
      _
    $region30: #{tpu_custom_call.1} parent=1 // pred_check_branch
      %491 = sbr.rel (0) target = $region32
    $region31: #{tpu_custom_call.1} parent=1 // pred_region
      %492 = dma.done [#allocation5], 128
    $region32: #{tpu_custom_call.1} parent=1 // pred_fallthru
      _
    %493 = vsyncpa [#allocation4], 1
    %494 = vsyncpa [#allocation5], 1

</llo_original>
